<compile_context>
chip_gen: v7x
topology: tpu7x:2x2x1
jax: 0.10.0
libtpu: 0.0.40
codegen_flags: <defaults>
</compile_context>

<pallas_src>
import jax
import jax.numpy as jnp
from jax import lax
from jax.experimental import pallas as pl
from jax.experimental.pallas import tpu as pltpu


def _build_fixed_pos_emb(dim: int, max_seq_len: int) -> jnp.ndarray:
    """Deterministic buffer identical to the PyTorch __init__."""
    inv_freq = 1.0 / (10000.0 ** (jnp.arange(0, dim, 2, dtype=jnp.float32) / dim))
    position = jnp.arange(0, max_seq_len, dtype=jnp.float32)
    sinusoid_inp = jnp.einsum("i,j->ij", position, inv_freq)        # (L, dim//2)
    emb = jnp.concatenate([jnp.sin(sinusoid_inp), jnp.cos(sinusoid_inp)], axis=-1)
    return emb.astype(jnp.float32)                                   # (L, dim)


def _gather_rows_kernel(idx_ref, emb_ref, out_ref):
    """One grid step: gather `tile` table rows selected by idx_ref (vectorized)."""
    table_len = emb_ref.shape[0]
    tile = out_ref.shape[0]

    idx = idx_ref[...]                                               # (tile, 1) int32
    row_ids = lax.broadcasted_iota(jnp.int32, (tile, table_len), 1)  # (tile, L)
    onehot = (row_ids == idx).astype(jnp.float32)                    # (tile, L)

    # Split the f32 table into an exactly-representable bf16 part plus a small
    # f32 residual: the one-hot matmul then reproduces the table rows to ~1e-6
    # independent of the MXU's f32 pass count.
    emb_f32 = emb_ref[...].astype(jnp.float32)                       # (L, dim)
    emb_hi = emb_f32.astype(jnp.bfloat16).astype(jnp.float32)
    emb_lo = emb_f32 - emb_hi

    gathered = (jnp.dot(onehot, emb_hi, preferred_element_type=jnp.float32)
                + jnp.dot(onehot, emb_lo, preferred_element_type=jnp.float32))
    out_ref[...] = gathered.astype(out_ref.dtype)


def fixed_positional_embedding(emb: jnp.ndarray,
                               residx: jnp.ndarray,
                               *,
                               tile: int = 512,
                               out_dtype=None) -> jnp.ndarray:
    """Pallas equivalent of FixedPositionalEmbedding.forward(residx)."""
    max_seq_len, dim = emb.shape
    out_dtype = emb.dtype if out_dtype is None else out_dtype
    orig_shape = residx.shape
    flat = jnp.reshape(residx, (-1,)).astype(jnp.int32)
    n = flat.shape[0]

    # Row-tile size: large enough to amortize per-grid-step overhead, rounded
    # to a sublane multiple (8).  Small inputs get a single exact-size tile so
    # padding (and wasted HBM writes) stay minimal.
    n_min = ((n + 7) // 8) * 8
    if n_min <= tile:
        tile_rows = n_min
    else:
        tile_rows = max(8, (tile // 8) * 8)
    n_pad = ((n + tile_rows - 1) // tile_rows) * tile_rows

    if n_pad != n:
        flat = jnp.concatenate([flat, jnp.zeros((n_pad - n,), jnp.int32)])
    idx2d = flat.reshape(n_pad, 1)

    grid = (n_pad // tile_rows,)

    # NOTE: with dim >= 128 the (tile, dim) output blocks are lane-dense
    # (unmasked stores).  For dim < 128 a further win would be packing several
    # gathered rows per 128-lane output row and unpacking in the wrapper.
    out = pl.pallas_call(
        _gather_rows_kernel,
        out_shape=jax.ShapeDtypeStruct((n_pad, dim), out_dtype),
        grid=grid,
        in_specs=[
            pl.BlockSpec((tile_rows, 1), lambda i: (i, 0)),          # indices (VMEM)
            pl.BlockSpec((max_seq_len, dim), lambda i: (0, 0)),      # full table (VMEM)
        ],
        out_specs=pl.BlockSpec((tile_rows, dim), lambda i: (i, 0)),
        compiler_params=pltpu.CompilerParams(
            dimension_semantics=("parallel",),
            vmem_limit_bytes=32 * 1024 * 1024,
        ),
    )(idx2d, emb)

    return out[:n].reshape(orig_shape + (dim,))


if __name__ == "__main__":
    dim = 128
    max_seq_len = 128
    batch, seq = 2, 8

    emb = _build_fixed_pos_emb(dim, max_seq_len)

    key = jax.random.PRNGKey(0)
    residx = jax.random.randint(key, (batch, seq), 0, max_seq_len, dtype=jnp.int32)

    out = fixed_positional_embedding(emb, residx)
    out = jax.block_until_ready(out)

    # Reference check (plain JAX gather, same semantics as emb[residx, :]).
    ref = emb[residx, :]
    assert out.shape == (batch, seq, dim), out.shape
    assert jnp.allclose(out, ref, rtol=1e-4, atol=1e-4), float(
        jnp.max(jnp.abs(out - ref)))

    print("KERNEL_OK")
</pallas_src>

<mosaic_0001>
module attributes {stable_mosaic.version = 11 : i64} {
  func.func @_gather_rows_kernel(%arg0: i32, %arg1: memref<16x1xi32, #tpu.memory_space<vmem>>, %arg2: memref<128x128xf32, #tpu.memory_space<vmem>>, %arg3: memref<16x128xf32, #tpu.memory_space<vmem>>) attributes {dimension_semantics = [#tpu.dimension_semantics<parallel>], iteration_bounds = array<i64: 1>, scalar_prefetch = 0 : i64, scratch_operands = 0 : i64, tpu.core_type = #tpu.core_type<tc>, window_params = [{transform_indices = @transform_0, window_bounds = array<i64: 16, 1>}, {pipeline_mode = #tpu.pipeline_mode<synchronous>, transform_indices = @transform_1, window_bounds = array<i64: 128, 128>}, {transform_indices = @transform_2, window_bounds = array<i64: 16, 128>}]} {
    %c0 = arith.constant 0 : index
    %c0_0 = arith.constant 0 : index
    %0 = vector.load %arg1[%c0, %c0_0] : memref<16x1xi32, #tpu.memory_space<vmem>>, vector<16x1xi32>
    %1 = tpu.iota {dimensions = array<i32: 1>} : vector<16x128xi32>
    %2 = vector.broadcast %0 : vector<16x1xi32> to vector<16x128xi32>
    %3 = arith.cmpi eq, %1, %2 : vector<16x128xi32>
    %4 = arith.extui %3 : vector<16x128xi1> to vector<16x128xi32>
    %5 = arith.sitofp %4 : vector<16x128xi32> to vector<16x128xf32>
    %c0_1 = arith.constant 0 : index
    %c0_2 = arith.constant 0 : index
    %6 = vector.load %arg2[%c0_1, %c0_2] : memref<128x128xf32, #tpu.memory_space<vmem>>, vector<128x128xf32>
    %7 = arith.truncf %6 : vector<128x128xf32> to vector<128x128xbf16>
    %8 = arith.extf %7 : vector<128x128xbf16> to vector<128x128xf32>
    %9 = arith.subf %6, %8 : vector<128x128xf32>
    %cst = arith.constant dense<0.000000e+00> : vector<16x128xf32>
    %10 = tpu.matmul %5, %8, %cst {dimension_numbers = #tpu.dot_dimension_numbers<[1], [0], [0], [1], [0, 0, 1, 1], [], []>} : vector<16x128xf32>, vector<128x128xf32>, vector<16x128xf32> -> vector<16x128xf32>
    %cst_3 = arith.constant dense<0.000000e+00> : vector<16x128xf32>
    %11 = tpu.matmul %5, %9, %cst_3 {dimension_numbers = #tpu.dot_dimension_numbers<[1], [0], [0], [1], [0, 0, 1, 1], [], []>} : vector<16x128xf32>, vector<128x128xf32>, vector<16x128xf32> -> vector<16x128xf32>
    %12 = arith.addf %10, %11 : vector<16x128xf32>
    %c0_4 = arith.constant 0 : index
    %c0_5 = arith.constant 0 : index
    %13 = vector.load %arg3[%c0_4, %c0_5] : memref<16x128xf32, #tpu.memory_space<vmem>>, vector<16x128xf32>
    tpu.vector_store %arg3[%c0_4, %c0_5], %12 {strides = array<i32>} : memref<16x128xf32, #tpu.memory_space<vmem>>, vector<16x128xf32>,
    return
  }
  func.func @transform_0(%arg0: i32) -> (i32, i32) {
    %c0_i32 = arith.constant 0 : i32
    %c0_i32_0 = arith.constant 0 : i32
    return %arg0, %c0_i32 : i32, i32
  }
  func.func @transform_1(%arg0: i32) -> (i32, i32) {
    %c0_i32 = arith.constant 0 : i32
    %c0_i32_0 = arith.constant 0 : i32
    %c0_i32_1 = arith.constant 0 : i32
    return %c0_i32, %c0_i32_0 : i32, i32
  }
  func.func @transform_2(%arg0: i32) -> (i32, i32) {
    %c0_i32 = arith.constant 0 : i32
    %c0_i32_0 = arith.constant 0 : i32
    return %arg0, %c0_i32 : i32, i32
  }
}

</mosaic_0001>

<llo_original>
// kernel: tpu_custom_call.1
$region0: #{tpu_custom_call.1}
  #allocation0 [shape = 'u32[]', space=smem, size = 0x4, offset = 0x4, fixed_abs, tag = 'smem constant byte address 0x4 - core index']
  #allocation1 [shape = 'u32[144,128]{1,0:T(1,128)}', space=vmem, size = 0x12000, scoped, tag = 'internal scratch']
  %s0 = inlined_call_operand.vmem [shape: s32[16,1], index: 0, kind: input, shape index: {}]
  %s1 = inlined_call_operand.hbm [shape: f32[128,128], index: 1, kind: input, shape index: {}]
  %s2 = inlined_call_operand.hbm [shape: f32[16,128], index: 2, kind: output, shape index: {}]
  %s3 = sld [smem:[#allocation0]]
  $region22: #{tpu_custom_call.1} parent=0
    _
  %s5 = ssub.s32 1, %s3
  %s6 = scalar_select 0, %s5, %s3
  $region1: #{tpu_custom_call.1} parent=0
    #allocation2 [shape = 'u8[65536]{0}', space=vmem, size = 0x10000, scoped, tag = 'input window, operand 1, single buffered']
    #allocation3 [shape = 's32[1]{0}', space=sflag, size = 0x4, scoped, tag = 'scoped memory for tpu_custom_call.1']
    #allocation4 [shape = 's32[1]{0}', space=sflag, size = 0x4, scoped, tag = 'scoped memory for tpu_custom_call.1']
    #allocation5 [shape = 'u8[8192]{0}', space=vmem, size = 0x2000, scoped, tag = 'output window, operand 0, single buffered']
    %7 = vsyncpa [#allocation3], 0
    %8 = vsyncpa [#allocation4], 0
    // Predicated region
    $region2: #{tpu_custom_call.1} parent=1 // pred_check
      _
    $region3: #{tpu_custom_call.1} parent=1 // pred_check_branch
      %10 = sbr.rel (0) target = $region5
    $region4: #{tpu_custom_call.1} parent=1 // pred_region
      _
    $region5: #{tpu_custom_call.1} parent=1 // pred_fallthru
      _
    // Predicated region
    $region6: #{tpu_custom_call.1} parent=1 // pred_check
      _
    $region7: #{tpu_custom_call.1} parent=1 // pred_check_branch
      %12 = sbr.rel (0) target = $region9
    $region8: #{tpu_custom_call.1} parent=1 // pred_region
      %s14 = ssub.s32 2048, 2048
      %15 = vsyncadd [#allocation3], %s14
      %s16 = sshll.u32 [#allocation2], 4
      %s17 = int_to_ptr.vmem [resolvable:$true] %s16
      %22 = dma.hbm_to_vmem [thread:$0]  %s1, 2048, %s17, [#allocation3], 128, 128, 8
    $region9: #{tpu_custom_call.1} parent=1 // pred_fallthru
      _
    // Predicated region
    $region10: #{tpu_custom_call.1} parent=1 // pred_check
      _
    $region11: #{tpu_custom_call.1} parent=1 // pred_check_branch
      %24 = sbr.rel (0) target = $region13
    $region12: #{tpu_custom_call.1} parent=1 // pred_region
      %25 = dma.done [#allocation3], 2048
    $region13: #{tpu_custom_call.1} parent=1 // pred_fallthru
      _
    %v26 = vld [vmem:[%s0] sm:$0xff]
    %v27 = vld [vmem:[%s0 + $0x8] sm:$0xff]
    %v28 = vlaneseq
    %v29 = vand.u32 %v28, 127
    %30 = vset.pattern.permute.xlu0 0
    %31 = vperm.xlu0 %30, %v26
    %v32 = vpop.permute.xlu0 %31
    %33 = vset.pattern.permute.xlu0 0
    %34 = vperm.xlu0 %33, %v27
    %v35 = vpop.permute.xlu0 %34
    %vm36 = vcmp.eq.s32.totalorder %v29, %v32
    %vm37 = vcmp.eq.s32.totalorder %v29, %v35
    %v38 = vsel %vm36, 1, 0
    %v39 = vsel %vm37, 1, 0
    %v40 = vcvt.s32.f32 %v38
    %v41 = vcvt.s32.f32 %v39
    %v42 = vld [vmem:[#allocation2] sm:$0xff]
    %v43 = vld [vmem:[#allocation2 + $0x8] sm:$0xff]
    %v44 = vld [vmem:[#allocation2 + $0x10] sm:$0xff]
    %v45 = vld [vmem:[#allocation2 + $0x18] sm:$0xff]
    %v46 = vld [vmem:[#allocation2 + $0x20] sm:$0xff]
    %v47 = vld [vmem:[#allocation2 + $0x28] sm:$0xff]
    %v48 = vld [vmem:[#allocation2 + $0x30] sm:$0xff]
    %v49 = vld [vmem:[#allocation2 + $0x38] sm:$0xff]
    %v50 = vld [vmem:[#allocation2 + $0x40] sm:$0xff]
    %v51 = vld [vmem:[#allocation2 + $0x48] sm:$0xff]
    %v52 = vld [vmem:[#allocation2 + $0x50] sm:$0xff]
    %v53 = vld [vmem:[#allocation2 + $0x58] sm:$0xff]
    %v54 = vld [vmem:[#allocation2 + $0x60] sm:$0xff]
    %v55 = vld [vmem:[#allocation2 + $0x68] sm:$0xff]
    %v56 = vld [vmem:[#allocation2 + $0x70] sm:$0xff]
    %v57 = vld [vmem:[#allocation2 + $0x78] sm:$0xff]
    %v58 = vpack.c.bf16 %v43, %v42
    %v59 = vpack.c.bf16 %v45, %v44
    %v60 = vpack.c.bf16 %v47, %v46
    %v61 = vpack.c.bf16 %v49, %v48
    %v62 = vpack.c.bf16 %v51, %v50
    %v63 = vpack.c.bf16 %v53, %v52
    %v64 = vpack.c.bf16 %v55, %v54
    %v65 = vpack.c.bf16 %v57, %v56
    %v66 = vunpack.c.l.bf16 %v58
    %v67 = vunpack.c.h.bf16 %v58
    %v68 = vunpack.c.l.bf16 %v59
    %v69 = vunpack.c.h.bf16 %v59
    %v70 = vunpack.c.l.bf16 %v60
    %v71 = vunpack.c.h.bf16 %v60
    %v72 = vunpack.c.l.bf16 %v61
    %v73 = vunpack.c.h.bf16 %v61
    %v74 = vunpack.c.l.bf16 %v62
    %v75 = vunpack.c.h.bf16 %v62
    %v76 = vunpack.c.l.bf16 %v63
    %v77 = vunpack.c.h.bf16 %v63
    %v78 = vunpack.c.l.bf16 %v64
    %v79 = vunpack.c.h.bf16 %v64
    %v80 = vunpack.c.l.bf16 %v65
    %v81 = vunpack.c.h.bf16 %v65
    %v82 = vsub.f32 %v42, %v66
    %v83 = vsub.f32 %v43, %v67
    %v84 = vsub.f32 %v44, %v68
    %v85 = vsub.f32 %v45, %v69
    %v86 = vsub.f32 %v46, %v70
    %v87 = vsub.f32 %v47, %v71
    %v88 = vsub.f32 %v48, %v72
    %v89 = vsub.f32 %v49, %v73
    %v90 = vsub.f32 %v50, %v74
    %v91 = vsub.f32 %v51, %v75
    %v92 = vsub.f32 %v52, %v76
    %v93 = vsub.f32 %v53, %v77
    %v94 = vsub.f32 %v54, %v78
    %v95 = vsub.f32 %v55, %v79
    %v96 = vsub.f32 %v56, %v80
    %v97 = vsub.f32 %v57, %v81
    %98 = vmatprep.subr.mxu0 0.0
    %99 = vmatpush1.msra.mxu0 %v82
    %100 = vmatprep.subr.mxu0 0.0
    %101 = vmatpush1.msra.mxu0 %v83
    %102 = vmatprep.subr.mxu0 0.0
    %103 = vmatpush1.msra.mxu0 %v84
    %104 = vmatprep.subr.mxu0 0.0
    %105 = vmatpush1.msra.mxu0 %v85
    %106 = vmatprep.subr.mxu0 0.0
    %107 = vmatpush1.msra.mxu0 %v86
    %108 = vmatprep.subr.mxu0 0.0
    %109 = vmatpush1.msra.mxu0 %v87
    %110 = vmatprep.subr.mxu0 0.0
    %111 = vmatpush1.msra.mxu0 %v88
    %112 = vmatprep.subr.mxu0 0.0
    %113 = vmatpush1.msra.mxu0 %v89
    %114 = vmatprep.subr.mxu0 0.0
    %115 = vmatpush1.msra.mxu0 %v90
    %116 = vmatprep.subr.mxu0 0.0
    %117 = vmatpush1.msra.mxu0 %v91
    %118 = vmatprep.subr.mxu0 0.0
    %119 = vmatpush1.msra.mxu0 %v92
    %120 = vmatprep.subr.mxu0 0.0
    %121 = vmatpush1.msra.mxu0 %v93
    %122 = vmatprep.subr.mxu0 0.0
    %123 = vmatpush1.msra.mxu0 %v94
    %124 = vmatprep.subr.mxu0 0.0
    %125 = vmatpush1.msra.mxu0 %v95
    %126 = vmatprep.subr.mxu0 0.0
    %127 = vmatpush1.msra.mxu0 %v96
    %128 = vmatprep.subr.mxu0 0.0
    %129 = vmatpush1.msra.mxu0 %v97
    %130 = vmatprep.subr.mxu0 0.0
    %131 = vmatpush1.msra.mxu0 0.0
    %132 = vmatprep.subr.mxu0 0.0
    %133 = vmatpush1.msra.mxu0 0.0
    %134 = vmatprep.subr.mxu0 0.0
    %135 = vmatpush1.msra.mxu0 0.0
    %136 = vmatprep.subr.mxu0 0.0
    %137 = vmatpush1.msra.mxu0 0.0
    %138 = vmatprep.subr.mxu0 0.0
    %139 = vmatpush1.msra.mxu0 0.0
    %140 = vmatprep.subr.mxu0 0.0
    %141 = vmatpush1.msra.mxu0 0.0
    %142 = vmatprep.subr.mxu0 0.0
    %143 = vmatpush1.msra.mxu0 0.0
    %144 = vmatprep.subr.mxu0 0.0
    %145 = vmatpush1.msra.mxu0 0.0
    %146 = vmatprep.subr.mxu0 0.0
    %147 = vmatpush1.msra.mxu0 0.0
    %148 = vmatprep.subr.mxu0 0.0
    %149 = vmatpush1.msra.mxu0 0.0
    %150 = vmatprep.subr.mxu0 0.0
    %151 = vmatpush1.msra.mxu0 0.0
    %152 = vmatprep.subr.mxu0 0.0
    %153 = vmatpush1.msra.mxu0 0.0
    %154 = vmatprep.subr.mxu0 0.0
    %155 = vmatpush1.msra.mxu0 0.0
    %156 = vmatprep.subr.mxu0 0.0
    %157 = vmatpush1.msra.mxu0 0.0
    %158 = vmatprep.subr.mxu0 0.0
    %159 = vmatpush1.msra.mxu0 0.0
    %160 = vmatprep.subr.mxu0 0.0
    %161 = vmatpush1.msra.mxu0 0.0
    %162 = vmatprep.mubr.f32.mxu0 0.0
    %163 = vmatmul.mubr.f32.gmra.mrb[0].mxu0 %v40
    %v164 = vpop.f32.mrb[0].mxu0
    %v165 = vadd.f32 0.0, %v164
    %v166 = vpop.f32.mrb[0].mxu0
    %167 = vmatprep.mubr.f32.mxu0 0.0
    %168 = vmatmul.mubr.f32.gmra.mrb[0].mxu0 %v41
    %v169 = vpop.f32.mrb[0].mxu0
    %v170 = vadd.f32 0.0, %v169
    %v171 = vpop.f32.mrb[0].mxu0
    %172 = vdwg.mxu0
    %173 = vmatprep.subr.mxu0 0.0
    %174 = vmatpush1.msra.mxu0 %v66
    %175 = vmatprep.subr.mxu0 0.0
    %176 = vmatpush1.msra.mxu0 %v67
    %177 = vmatprep.subr.mxu0 0.0
    %178 = vmatpush1.msra.mxu0 %v68
    %179 = vmatprep.subr.mxu0 0.0
    %180 = vmatpush1.msra.mxu0 %v69
    %181 = vmatprep.subr.mxu0 0.0
    %182 = vmatpush1.msra.mxu0 %v70
    %183 = vmatprep.subr.mxu0 0.0
    %184 = vmatpush1.msra.mxu0 %v71
    %185 = vmatprep.subr.mxu0 0.0
    %186 = vmatpush1.msra.mxu0 %v72
    %187 = vmatprep.subr.mxu0 0.0
    %188 = vmatpush1.msra.mxu0 %v73
    %189 = vmatprep.subr.mxu0 0.0
    %190 = vmatpush1.msra.mxu0 %v74
    %191 = vmatprep.subr.mxu0 0.0
    %192 = vmatpush1.msra.mxu0 %v75
    %193 = vmatprep.subr.mxu0 0.0
    %194 = vmatpush1.msra.mxu0 %v76
    %195 = vmatprep.subr.mxu0 0.0
    %196 = vmatpush1.msra.mxu0 %v77
    %197 = vmatprep.subr.mxu0 0.0
    %198 = vmatpush1.msra.mxu0 %v78
    %199 = vmatprep.subr.mxu0 0.0
    %200 = vmatpush1.msra.mxu0 %v79
    %201 = vmatprep.subr.mxu0 0.0
    %202 = vmatpush1.msra.mxu0 %v80
    %203 = vmatprep.subr.mxu0 0.0
    %204 = vmatpush1.msra.mxu0 %v81
    %205 = vmatprep.subr.mxu0 0.0
    %206 = vmatpush1.msra.mxu0 0.0
    %207 = vmatprep.subr.mxu0 0.0
    %208 = vmatpush1.msra.mxu0 0.0
    %209 = vmatprep.subr.mxu0 0.0
    %210 = vmatpush1.msra.mxu0 0.0
    %211 = vmatprep.subr.mxu0 0.0
    %212 = vmatpush1.msra.mxu0 0.0
    %213 = vmatprep.subr.mxu0 0.0
    %214 = vmatpush1.msra.mxu0 0.0
    %215 = vmatprep.subr.mxu0 0.0
    %216 = vmatpush1.msra.mxu0 0.0
    %217 = vmatprep.subr.mxu0 0.0
    %218 = vmatpush1.msra.mxu0 0.0
    %219 = vmatprep.subr.mxu0 0.0
    %220 = vmatpush1.msra.mxu0 0.0
    %221 = vmatprep.subr.mxu0 0.0
    %222 = vmatpush1.msra.mxu0 0.0
    %223 = vmatprep.subr.mxu0 0.0
    %224 = vmatpush1.msra.mxu0 0.0
    %225 = vmatprep.subr.mxu0 0.0
    %226 = vmatpush1.msra.mxu0 0.0
    %227 = vmatprep.subr.mxu0 0.0
    %228 = vmatpush1.msra.mxu0 0.0
    %229 = vmatprep.subr.mxu0 0.0
    %230 = vmatpush1.msra.mxu0 0.0
    %231 = vmatprep.subr.mxu0 0.0
    %232 = vmatpush1.msra.mxu0 0.0
    %233 = vmatprep.subr.mxu0 0.0
    %234 = vmatpush1.msra.mxu0 0.0
    %235 = vmatprep.subr.mxu0 0.0
    %236 = vmatpush1.msra.mxu0 0.0
    %237 = vmatprep.mubr.f32.mxu0 0.0
    %238 = vmatmul.mubr.f32.gmra.mrb[0].mxu0 %v40
    %v239 = vpop.f32.mrb[0].mxu0
    %v240 = vadd.f32 %v165, %v239
    %v241 = vpop.f32.mrb[0].mxu0
    %242 = vmatprep.mubr.f32.mxu0 0.0
    %243 = vmatmul.mubr.f32.gmra.mrb[0].mxu0 %v41
    %v244 = vpop.f32.mrb[0].mxu0
    %v245 = vadd.f32 %v170, %v244
    %v246 = vpop.f32.mrb[0].mxu0
    %247 = vdwg.mxu0
    %248 = vst [vmem:[#allocation5] sm:$0xff] %v240
    %249 = vst [vmem:[#allocation5 + $0x8] sm:$0xff] %v245
    // Predicated region
    $region14: #{tpu_custom_call.1} parent=1 // pred_check
      _
    $region15: #{tpu_custom_call.1} parent=1 // pred_check_branch
      %251 = sbr.rel (0) target = $region17
    $region16: #{tpu_custom_call.1} parent=1 // pred_region
      %s253 = ssub.s32 256, 256
      %254 = vsyncadd [#allocation4], %s253
      %s255 = sshll.u32 [#allocation5], 4
      %s256 = int_to_ptr.vmem [resolvable:$true] %s255
      %261 = dma.vmem_to_hbm [thread:$0]  %s256, 256, %s2, [#allocation4], 128, 128, 8
    $region17: #{tpu_custom_call.1} parent=1 // pred_fallthru
      _
    // Predicated region
    $region18: #{tpu_custom_call.1} parent=1 // pred_check
      _
    $region19: #{tpu_custom_call.1} parent=1 // pred_check_branch
      %263 = sbr.rel (0) target = $region21
    $region20: #{tpu_custom_call.1} parent=1 // pred_region
      %264 = dma.done [#allocation4], 256
    $region21: #{tpu_custom_call.1} parent=1 // pred_fallthru
      _
    %265 = vsyncpa [#allocation3], 1
    %266 = vsyncpa [#allocation4], 1

</llo_original>
